<compile_context>
chip_gen: v7x
topology: tpu7x:2x2x1
jax: 0.10.0
libtpu: 0.0.40
codegen_flags: <defaults>
</compile_context>

<pallas_src>
import jax
import jax.numpy as jnp
from jax import lax
from jax.experimental import pallas as pl
from jax.experimental.pallas import tpu as pltpu

EPS = 1e-8  # MultichannelLayerNorm eps (shared with the pure-JAX reference below)


def _frame_encoder_kernel(x_ref, gamma_ref, beta_ref, sel_ref, w1_ref, w2_ref, o_ref):
    """One batch group: x (1,H,Nin) -> o (1,Ho,Nout); Nin=Bt*W*Cin, Nout=Bt*W*Cout."""
    H, Nin = x_ref.shape[1], x_ref.shape[2]
    Ho, Nout = o_ref.shape[1], o_ref.shape[2]

    x = x_ref[0]                                                   # (H, Nin) f32

    # ---- MultichannelLayerNorm over the features (H) axis, per (batch, frame, chan) lane.
    mean = jnp.mean(x, axis=0, keepdims=True)
    var = jnp.mean(jnp.square(x - mean), axis=0, keepdims=True)
    h = (x - mean) * lax.rsqrt(var + EPS) * gamma_ref[...] + beta_ref[...]

    # ---- conv1 (3x3, pad 1, stride 1) as ONE dot: row taps concatenated on K; the dx
    #      tap, channel contraction, W zero-padding and bias live in the banded weight.
    zi = jnp.zeros((1, Nin), jnp.float32)
    a1 = jnp.concatenate([
        jnp.concatenate([zi, h[:H - 1]], axis=0),      # rows y-1  (dy=0 tap)
        h,                                             # rows y    (dy=1 tap)
        jnp.concatenate([h[1:], zi], axis=0),          # rows y+1  (dy=2 tap)
        jnp.ones((H, 1), jnp.float32),                 # conv1 bias column
    ], axis=1).astype(jnp.bfloat16)                    # (H, 3*Nin+1)
    h1 = jnp.maximum(
        jnp.dot(a1, w1_ref[...], preferred_element_type=jnp.float32), 0.0)
    # TODO(synk): ResBlock activation assumed to be plain torch.relu (not SquaredReLU).

    # ---- stride-(2,1) row decimation + conv2 row taps: ONE host-built 0/1 selection
    #      dot gathers h1 (and raw x for the identity path) at rows {2y-1, 2y, 2y+1}.
    gsrc = jnp.concatenate([h1, x], axis=1).astype(jnp.bfloat16)   # (H, Nout+Nin)
    g = jnp.dot(sel_ref[...], gsrc, preferred_element_type=jnp.float32)  # (3*Ho, Nout+Nin)

    # ---- conv2 (3x3, pad 1, stride (2,1)) + identity 1x1 (stride (2,1)) + both biases
    #      fused into ONE dot against the host-built (3*Nout + Nin + 1, Nout) weight.
    a2 = jnp.concatenate([
        g[0 * Ho:1 * Ho, :Nout],                       # h1[2y-1]  (dy=0 tap)
        g[1 * Ho:2 * Ho, :Nout],                       # h1[2y]    (dy=1 tap)
        g[2 * Ho:3 * Ho, :Nout],                       # h1[2y+1]  (dy=2 tap)
        g[1 * Ho:2 * Ho, Nout:],                       # x[2y]     (identity path)
        jnp.ones((Ho, 1), jnp.float32),                # conv2 + identity bias column
    ], axis=1).astype(jnp.bfloat16)                    # (Ho, 3*Nout+Nin+1)
    o_ref[0] = jnp.dot(a2, w2_ref[...],
                       preferred_element_type=jnp.float32).astype(o_ref.dtype)


# --------------------------------------------------------------------------------------
# Host-side (run once per parameter set) weight/constant preparation.
# --------------------------------------------------------------------------------------
def _per_group_band(w_oihw, frames):
    """(3, W*Cin, W*Cout): per row tap dy, the dx tap & channel contraction fused.

    band[dy][(w+dx-1)*Cin + ci, w*Cout + co] = w[co, ci, dy, dx]; zero outside the
    valid W range (realizes the width zero-padding inside the weight matrix).
    """
    cout, cin = w_oihw.shape[0], w_oihw.shape[1]
    w_hwio = jnp.transpose(w_oihw, (2, 3, 1, 0)).astype(jnp.float32)   # (3,3,cin,cout)
    w_in = jnp.arange(frames)[:, None]
    w_out = jnp.arange(frames)[None, :]
    bands = []
    for dy in range(3):
        m = jnp.zeros((frames, cin, frames, cout), jnp.float32)
        for dx in range(3):
            sel = (w_in == w_out + dx - 1).astype(jnp.float32)          # (W, W) band
            m = m + sel[:, None, :, None] * w_hwio[dy, dx][None, :, None, :]
        bands.append(m.reshape(frames * cin, frames * cout))
    return jnp.stack(bands)


def _pick_batch_tile(batch, out_lanes_per_item):
    """Smallest divisor of `batch` giving >=128 output lanes (lane-dense stores),
    capped so the block-diagonal fused weights stay small (they grow as Bt^2)."""
    target = max(1, -(-128 // out_lanes_per_item))       # ceil(128 / lanes per item)
    cap = max(1, 512 // out_lanes_per_item)
    best = 1
    for bt in range(1, batch + 1):
        if batch % bt:
            continue
        if bt <= cap:
            best = bt
        if best >= target:
            break
    return best


def prepare_frame_encoder(params, batch, frames):
    """Build all kernel-resident constants ONCE per parameter set (cache the result)."""
    cin, feats = params["norm_w"].shape                  # (Cin, features=H)
    cout = params["w1"].shape[0]
    W, H, Ho = frames, feats, feats // 2
    assert H % 2 == 0, "features (H) must be even for stride (2,1) downsample"
    bt = _pick_batch_tile(batch, W * cout)
    n_in = bt * W * cin

    def blockdiag(mat):                                  # block-diagonal over batch tile
        return jnp.kron(jnp.eye(bt, dtype=mat.dtype), mat)

    # conv1 fused weight: 3 row-tap bands stacked on K + bias row.     (3*Nin+1, Nout)
    band1 = _per_group_band(params["w1"], W)
    w1f = jnp.concatenate(
        [blockdiag(band1[dy]) for dy in range(3)]
        + [jnp.tile(params["b1"].astype(jnp.float32), bt * W)[None, :]],
        axis=0).astype(jnp.bfloat16)

    # conv2 + identity 1x1 + combined bias fused weight.       (3*Nout + Nin + 1, Nout)
    band2 = _per_group_band(params["w2"], W)
    wid = jnp.kron(jnp.eye(W, dtype=jnp.float32),
                   params["wid"][:, :, 0, 0].T.astype(jnp.float32))    # (W*Cin, W*Cout)
    bias2 = (jnp.tile(params["b2"].astype(jnp.float32), bt * W)
             + jnp.tile(params["bid"].astype(jnp.float32), bt * W))[None, :]
    w2f = jnp.concatenate(
        [blockdiag(band2[dy]) for dy in range(3)] + [blockdiag(wid), bias2],
        axis=0).astype(jnp.bfloat16)
    # TODO(synk): for large frame counts W the (W*C)^2 bands can exceed v7x's 64 MiB
    #   VMEM; tile W across a grid axis (block-banded weights, 1-column halo) first.

    # row-selection matrix for the stride-(2,1) taps: rows {2y-1, 2y, 2y+1}. (3*Ho, H)
    r = jnp.arange(Ho)[:, None]
    c = jnp.arange(H)[None, :]
    sel = jnp.concatenate([c == 2 * r - 1, c == 2 * r, c == 2 * r + 1],
                          axis=0).astype(jnp.bfloat16)

    # LayerNorm affine, pre-tiled over (batch tile, frames): (H, Nin)
    gamma = jnp.broadcast_to(params["norm_w"].T.astype(jnp.float32)[:, None, None, :],
                             (H, bt, W, cin)).reshape(H, n_in)
    beta = jnp.broadcast_to(params["norm_b"].T.astype(jnp.float32)[:, None, None, :],
                            (H, bt, W, cin)).reshape(H, n_in)

    return {"gamma": gamma, "beta": beta, "sel": sel, "w1f": w1f, "w2f": w2f}


def frame_encoder_forward(x_nchw, prep, out_dtype=jnp.float32):
    """x: (B, Cin, H, W) -> (B, Cout, H//2, W).  `prep` from prepare_frame_encoder."""
    B, Cin, H, W = x_nchw.shape
    n_in = prep["gamma"].shape[1]
    n_out = prep["w1f"].shape[1]
    Bt = n_in // (W * Cin)
    Cout = n_out // (Bt * W)
    Ho = H // 2
    assert B % Bt == 0 and H % 2 == 0
    G = B // Bt

    # Activation layout plumbing only (weights prepared once elsewhere):
    # NCHW -> (G, H, Bt*W*Cin) with (batch-in-group, frame, channel) on the lane axis.
    x_flat = (jnp.transpose(x_nchw, (0, 2, 3, 1))
              .reshape(G, Bt, H, W, Cin)
              .transpose(0, 2, 1, 3, 4)
              .reshape(G, H, n_in)
              .astype(jnp.float32))

    def full_spec(shape):
        return pl.BlockSpec(shape, lambda g, _n=len(shape): (0,) * _n)

    grid_spec = pltpu.PrefetchScalarGridSpec(
        num_scalar_prefetch=0,
        grid=(G,),
        in_specs=[
            pl.BlockSpec((1, H, n_in), lambda g: (g, 0, 0)),
            full_spec(prep["gamma"].shape),
            full_spec(prep["beta"].shape),
            full_spec(prep["sel"].shape),
            full_spec(prep["w1f"].shape),
            full_spec(prep["w2f"].shape),
        ],
        out_specs=pl.BlockSpec((1, Ho, n_out), lambda g: (g, 0, 0)),
    )

    out_flat = pl.pallas_call(
        _frame_encoder_kernel,
        out_shape=jax.ShapeDtypeStruct((G, Ho, n_out), out_dtype),
        grid_spec=grid_spec,
        compiler_params=pltpu.CompilerParams(
            dimension_semantics=("parallel",),     # batch groups shard across TCs (v7x)
            vmem_limit_bytes=48 * 1024 * 1024,     # <= v7x 64 MiB physical per TC
        ),
    )(x_flat, prep["gamma"], prep["beta"], prep["sel"], prep["w1f"], prep["w2f"])

    # (G, Ho, Bt*W*Cout) lane slab -> NCHW.  (If FrameEncoders are stacked, keep the
    # lane-slab layout between layers and skip this transpose.)
    return (out_flat.reshape(G, Ho, Bt, W, Cout)
            .transpose(0, 2, 4, 1, 3)
            .reshape(B, Cout, Ho, W))


def reference_forward(x, p):
    """Pure-JAX f32 (NCHW) reference of the ResBlock forward."""
    xt = jnp.swapaxes(x, 2, 3)                                 # (B,C,W,H)
    mean = xt.mean(-1, keepdims=True)
    var = ((xt - mean) ** 2).mean(-1, keepdims=True)
    xn = (xt - mean) / jnp.sqrt(var + EPS)
    xn = xn * p["norm_w"][None, :, None, :] + p["norm_b"][None, :, None, :]
    h = jnp.swapaxes(xn, 2, 3)                                 # (B,C,H,W)

    dn = ("NCHW", "OIHW", "NCHW")
    h1 = lax.conv_general_dilated(h, p["w1"], (1, 1), ((1, 1), (1, 1)),
                                  dimension_numbers=dn) + p["b1"][None, :, None, None]
    h1 = jnp.maximum(h1, 0.0)
    h2 = lax.conv_general_dilated(h1, p["w2"], (2, 1), ((1, 1), (1, 1)),
                                  dimension_numbers=dn) + p["b2"][None, :, None, None]
    idp = lax.conv_general_dilated(x, p["wid"], (2, 1), ((0, 0), (0, 0)),
                                   dimension_numbers=dn) + p["bid"][None, :, None, None]
    return idp + h2


if __name__ == "__main__":
    B, Cin, Cout, F, W = 2, 4, 8, 16, 8   # features = H = 16, frames = W = 8

    key = jax.random.PRNGKey(0)
    ks = jax.random.split(key, 10)
    params = {
        "norm_w": jnp.ones((Cin, F), jnp.float32) + 0.1 * jax.random.normal(ks[0], (Cin, F), jnp.float32),
        "norm_b": 0.1 * jax.random.normal(ks[1], (Cin, F), jnp.float32),
        "w1": 0.1 * jax.random.normal(ks[2], (Cout, Cin, 3, 3), jnp.float32),
        "b1": 0.1 * jax.random.normal(ks[3], (Cout,), jnp.float32),
        "w2": 0.1 * jax.random.normal(ks[4], (Cout, Cout, 3, 3), jnp.float32),
        "b2": 0.1 * jax.random.normal(ks[5], (Cout,), jnp.float32),
        "wid": 0.1 * jax.random.normal(ks[6], (Cout, Cin, 1, 1), jnp.float32),
        "bid": 0.1 * jax.random.normal(ks[7], (Cout,), jnp.float32),
    }
    x = jax.random.normal(ks[8], (B, Cin, F, W), jnp.float32)

    # Weight banding / affine tiling: once per parameter set.
    prep = jax.block_until_ready(prepare_frame_encoder(params, B, W))

    fwd = jax.jit(frame_encoder_forward, static_argnames=("out_dtype",))
    out = jax.block_until_ready(fwd(x, prep))

    ref = jax.block_until_ready(reference_forward(x, params))
    assert out.shape == (B, Cout, F // 2, W), out.shape
    # Conv / identity operands run in bf16 on the MXU (f32 accumulation), so the f32
    # reference differs by O(1e-2) at worst at these magnitudes.
    max_err = float(jnp.max(jnp.abs(out - ref)))
    assert max_err < 4e-2, f"mismatch vs reference: {max_err}"

    print("KERNEL_OK")
</pallas_src>

<mosaic_0001>
module attributes {stable_mosaic.version = 11 : i64} {
  func.func @_frame_encoder_kernel(%arg0: i32, %arg1: memref<1x16x64xf32, #tpu.memory_space<vmem>>, %arg2: memref<16x64xf32, #tpu.memory_space<vmem>>, %arg3: memref<16x64xf32, #tpu.memory_space<vmem>>, %arg4: memref<24x16xbf16, #tpu.memory_space<vmem>>, %arg5: memref<193x128xbf16, #tpu.memory_space<vmem>>, %arg6: memref<449x128xbf16, #tpu.memory_space<vmem>>, %arg7: memref<1x8x128xf32, #tpu.memory_space<vmem>>) attributes {dimension_semantics = [#tpu.dimension_semantics<parallel>], iteration_bounds = array<i64: 1>, scalar_prefetch = 0 : i64, scratch_operands = 0 : i64, tpu.core_type = #tpu.core_type<tc>, window_params = [{transform_indices = @transform_0, window_bounds = array<i64: 1, 16, 64>}, {pipeline_mode = #tpu.pipeline_mode<synchronous>, transform_indices = @transform_1, window_bounds = array<i64: 16, 64>}, {pipeline_mode = #tpu.pipeline_mode<synchronous>, transform_indices = @transform_2, window_bounds = array<i64: 16, 64>}, {pipeline_mode = #tpu.pipeline_mode<synchronous>, transform_indices = @transform_3, window_bounds = array<i64: 24, 16>}, {pipeline_mode = #tpu.pipeline_mode<synchronous>, transform_indices = @transform_4, window_bounds = array<i64: 193, 128>}, {pipeline_mode = #tpu.pipeline_mode<synchronous>, transform_indices = @transform_5, window_bounds = array<i64: 449, 128>}, {transform_indices = @transform_6, window_bounds = array<i64: 1, 8, 128>}]} {
    %c0 = arith.constant 0 : index
    %c0_0 = arith.constant 0 : index
    %c0_1 = arith.constant 0 : index
    %0 = vector.load %arg1[%c0, %c0_0, %c0_1] : memref<1x16x64xf32, #tpu.memory_space<vmem>>, vector<1x16x64xf32>
    %1 = vector.shape_cast %0 : vector<1x16x64xf32> to vector<16x64xf32>
    %cst = arith.constant dense<0.000000e+00> : vector<64xf32>
    %2 = vector.multi_reduction <add>, %1, %cst [0] : vector<16x64xf32> to vector<64xf32>
    %3 = vector.shape_cast %2 : vector<64xf32> to vector<1x64xf32>
    %cst_2 = arith.constant 1.600000e+01 : f32
    %4 = vector.broadcast %cst_2 : f32 to vector<1x64xf32>
    %5 = arith.divf %3, %4 : vector<1x64xf32>
    %6 = vector.broadcast %5 : vector<1x64xf32> to vector<16x64xf32>
    %7 = arith.subf %1, %6 : vector<16x64xf32>
    %8 = arith.mulf %7, %7 : vector<16x64xf32>
    %cst_3 = arith.constant dense<0.000000e+00> : vector<64xf32>
    %9 = vector.multi_reduction <add>, %8, %cst_3 [0] : vector<16x64xf32> to vector<64xf32>
    %10 = vector.shape_cast %9 : vector<64xf32> to vector<1x64xf32>
    %cst_4 = arith.constant 1.600000e+01 : f32
    %11 = vector.broadcast %cst_4 : f32 to vector<1x64xf32>
    %12 = arith.divf %10, %11 : vector<1x64xf32>
    %13 = vector.broadcast %5 : vector<1x64xf32> to vector<16x64xf32>
    %14 = arith.subf %1, %13 : vector<16x64xf32>
    %cst_5 = arith.constant 9.99999993E-9 : f32
    %15 = vector.broadcast %cst_5 : f32 to vector<1x64xf32>
    %16 = arith.addf %12, %15 : vector<1x64xf32>
    %17 = math.rsqrt %16 : vector<1x64xf32>
    %18 = vector.broadcast %17 : vector<1x64xf32> to vector<16x64xf32>
    %19 = arith.mulf %14, %18 : vector<16x64xf32>
    %c0_6 = arith.constant 0 : index
    %c0_7 = arith.constant 0 : index
    %20 = vector.load %arg2[%c0_6, %c0_7] : memref<16x64xf32, #tpu.memory_space<vmem>>, vector<16x64xf32>
    %21 = arith.mulf %19, %20 : vector<16x64xf32>
    %c0_8 = arith.constant 0 : index
    %c0_9 = arith.constant 0 : index
    %22 = vector.load %arg3[%c0_8, %c0_9] : memref<16x64xf32, #tpu.memory_space<vmem>>, vector<16x64xf32>
    %23 = arith.addf %21, %22 : vector<16x64xf32>
    %cst_10 = arith.constant 0.000000e+00 : f32
    %24 = vector.broadcast %cst_10 : f32 to vector<1x64xf32>
    %25 = vector.extract_strided_slice %23 {offsets = [0, 0], sizes = [15, 64], strides = [1, 1]} : vector<16x64xf32> to vector<15x64xf32>
    %26 = tpu.concatenate %24, %25 in 0 : vector<1x64xf32>, vector<15x64xf32> -> vector<16x64xf32>
    %27 = vector.extract_strided_slice %23 {offsets = [1, 0], sizes = [15, 64], strides = [1, 1]} : vector<16x64xf32> to vector<15x64xf32>
    %28 = tpu.concatenate %27, %24 in 0 : vector<15x64xf32>, vector<1x64xf32> -> vector<16x64xf32>
    %cst_11 = arith.constant 1.000000e+00 : f32
    %29 = vector.broadcast %cst_11 : f32 to vector<16x1xf32>
    %30 = tpu.concatenate %26, %23, %28, %29 in 1 : vector<16x64xf32>, vector<16x64xf32>, vector<16x64xf32>, vector<16x1xf32> -> vector<16x193xf32>
    %31 = arith.truncf %30 : vector<16x193xf32> to vector<16x193xbf16>
    %c0_12 = arith.constant 0 : index
    %c0_13 = arith.constant 0 : index
    %32 = vector.load %arg5[%c0_12, %c0_13] : memref<193x128xbf16, #tpu.memory_space<vmem>>, vector<193x128xbf16>
    %cst_14 = arith.constant dense<0.000000e+00> : vector<16x128xf32>
    %33 = tpu.matmul %31, %32, %cst_14 {dimension_numbers = #tpu.dot_dimension_numbers<[1], [0], [0], [1], [0, 0, 1, 1], [], []>} : vector<16x193xbf16>, vector<193x128xbf16>, vector<16x128xf32> -> vector<16x128xf32>
    %cst_15 = arith.constant 0.000000e+00 : f32
    %34 = vector.broadcast %cst_15 : f32 to vector<16x128xf32>
    %35 = arith.maximumf %33, %34 : vector<16x128xf32>
    %36 = tpu.concatenate %35, %1 in 1 : vector<16x128xf32>, vector<16x64xf32> -> vector<16x192xf32>
    %37 = arith.truncf %36 : vector<16x192xf32> to vector<16x192xbf16>
    %c0_16 = arith.constant 0 : index
    %c0_17 = arith.constant 0 : index
    %38 = vector.load %arg4[%c0_16, %c0_17] : memref<24x16xbf16, #tpu.memory_space<vmem>>, vector<24x16xbf16>
    %cst_18 = arith.constant dense<0.000000e+00> : vector<24x192xf32>
    %39 = tpu.matmul %38, %37, %cst_18 {dimension_numbers = #tpu.dot_dimension_numbers<[1], [0], [0], [1], [0, 0, 1, 1], [], []>} : vector<24x16xbf16>, vector<16x192xbf16>, vector<24x192xf32> -> vector<24x192xf32>
    %40 = vector.extract_strided_slice %39 {offsets = [0, 0], sizes = [8, 128], strides = [1, 1]} : vector<24x192xf32> to vector<8x128xf32>
    %41 = vector.extract_strided_slice %39 {offsets = [8, 0], sizes = [8, 128], strides = [1, 1]} : vector<24x192xf32> to vector<8x128xf32>
    %42 = vector.extract_strided_slice %39 {offsets = [16, 0], sizes = [8, 128], strides = [1, 1]} : vector<24x192xf32> to vector<8x128xf32>
    %43 = vector.extract_strided_slice %39 {offsets = [8, 128], sizes = [8, 64], strides = [1, 1]} : vector<24x192xf32> to vector<8x64xf32>
    %cst_19 = arith.constant 1.000000e+00 : f32
    %44 = vector.broadcast %cst_19 : f32 to vector<8x1xf32>
    %45 = tpu.concatenate %40, %41, %42, %43, %44 in 1 : vector<8x128xf32>, vector<8x128xf32>, vector<8x128xf32>, vector<8x64xf32>, vector<8x1xf32> -> vector<8x449xf32>
    %46 = arith.truncf %45 : vector<8x449xf32> to vector<8x449xbf16>
    %c0_20 = arith.constant 0 : index
    %c0_21 = arith.constant 0 : index
    %47 = vector.load %arg6[%c0_20, %c0_21] : memref<449x128xbf16, #tpu.memory_space<vmem>>, vector<449x128xbf16>
    %cst_22 = arith.constant dense<0.000000e+00> : vector<8x128xf32>
    %48 = tpu.matmul %46, %47, %cst_22 {dimension_numbers = #tpu.dot_dimension_numbers<[1], [0], [0], [1], [0, 0, 1, 1], [], []>} : vector<8x449xbf16>, vector<449x128xbf16>, vector<8x128xf32> -> vector<8x128xf32>
    %c0_23 = arith.constant 0 : index
    %c0_24 = arith.constant 0 : index
    %c0_25 = arith.constant 0 : index
    %49 = vector.load %arg7[%c0_23, %c0_24, %c0_25] : memref<1x8x128xf32, #tpu.memory_space<vmem>>, vector<1x8x128xf32>
    %50 = vector.shape_cast %49 : vector<1x8x128xf32> to vector<8x128xf32>
    %51 = vector.shape_cast %48 : vector<8x128xf32> to vector<1x8x128xf32>
    tpu.vector_store %arg7[%c0_23, %c0_24, %c0_25], %51 {strides = array<i32>} : memref<1x8x128xf32, #tpu.memory_space<vmem>>, vector<1x8x128xf32>,
    return
  }
  func.func @transform_0(%arg0: i32) -> (i32, i32, i32) {
    %c0_i32 = arith.constant 0 : i32
    %c0_i32_0 = arith.constant 0 : i32
    %c0_i32_1 = arith.constant 0 : i32
    return %arg0, %c0_i32, %c0_i32_0 : i32, i32, i32
  }
  func.func @transform_1(%arg0: i32) -> (i32, i32) {
    %c0_i32 = arith.constant 0 : i32
    %c0_i32_0 = arith.constant 0 : i32
    %c0_i32_1 = arith.constant 0 : i32
    return %c0_i32, %c0_i32_0 : i32, i32
  }
  func.func @transform_2(%arg0: i32) -> (i32, i32) {
    %c0_i32 = arith.constant 0 : i32
    %c0_i32_0 = arith.constant 0 : i32
    %c0_i32_1 = arith.constant 0 : i32
    return %c0_i32, %c0_i32_0 : i32, i32
  }
  func.func @transform_3(%arg0: i32) -> (i32, i32) {
    %c0_i32 = arith.constant 0 : i32
    %c0_i32_0 = arith.constant 0 : i32
    %c0_i32_1 = arith.constant 0 : i32
    return %c0_i32, %c0_i32_0 : i32, i32
  }
  func.func @transform_4(%arg0: i32) -> (i32, i32) {
    %c0_i32 = arith.constant 0 : i32
    %c0_i32_0 = arith.constant 0 : i32
    %c0_i32_1 = arith.constant 0 : i32
    return %c0_i32, %c0_i32_0 : i32, i32
  }
  func.func @transform_5(%arg0: i32) -> (i32, i32) {
    %c0_i32 = arith.constant 0 : i32
    %c0_i32_0 = arith.constant 0 : i32
    %c0_i32_1 = arith.constant 0 : i32
    return %c0_i32, %c0_i32_0 : i32, i32
  }
  func.func @transform_6(%arg0: i32) -> (i32, i32, i32) {
    %c0_i32 = arith.constant 0 : i32
    %c0_i32_0 = arith.constant 0 : i32
    %c0_i32_1 = arith.constant 0 : i32
    return %arg0, %c0_i32, %c0_i32_0 : i32, i32, i32
  }
}

</mosaic_0001>

<llo_original>
// kernel: frame_encoder_forward.1
$region0: #{frame_encoder_forward.1}
  #allocation0 [shape = 'u32[]', space=smem, size = 0x4, offset = 0x4, fixed_abs, tag = 'smem constant byte address 0x4 - core index']
  #allocation1 [shape = 'u32[144,128]{1,0:T(1,128)}', space=vmem, size = 0x12000, scoped, tag = 'internal scratch']
  %s0 = inlined_call_operand.vmem [shape: f32[1,16,64], index: 0, kind: input, shape index: {}]
  %s1 = inlined_call_operand.vmem [shape: f32[16,64], index: 1, kind: input, shape index: {}]
  %s2 = inlined_call_operand.hbm [shape: f32[16,64], index: 2, kind: input, shape index: {}]
  %s3 = inlined_call_operand.vmem [shape: bf16[24,16], index: 3, kind: input, shape index: {}]
  %s4 = inlined_call_operand.hbm [shape: bf16[193,128], index: 4, kind: input, shape index: {}]
  %s5 = inlined_call_operand.vmem [shape: bf16[449,128], index: 5, kind: input, shape index: {}]
  %s6 = inlined_call_operand.vmem [shape: f32[1,8,128], index: 6, kind: output, shape index: {}]
  %s7 = sld [smem:[#allocation0]]
  $region42: #{frame_encoder_forward.1} parent=0
    _
  %s9 = ssub.s32 1, %s7
  %s10 = scalar_select 0, %s9, %s7
  $region1: #{frame_encoder_forward.1} parent=0
    #allocation2 [shape = 'u8[8192]{0}', space=vmem, size = 0x2000, scoped, tag = 'input window, operand 2, single buffered']
    #allocation3 [shape = 's32[1]{0}', space=sflag, size = 0x4, scoped, tag = 'scoped memory for frame_encoder_forward.1']
    #allocation4 [shape = 'u8[51200]{0}', space=vmem, size = 0xc800, scoped, tag = 'input window, operand 4, single buffered']
    #allocation5 [shape = 's32[1]{0}', space=sflag, size = 0x4, scoped, tag = 'scoped memory for frame_encoder_forward.1']
    %11 = vsyncpa [#allocation3], 0
    %12 = vsyncpa [#allocation5], 0
    // Predicated region
    $region2: #{frame_encoder_forward.1} parent=1 // pred_check
      _
    $region3: #{frame_encoder_forward.1} parent=1 // pred_check_branch
      %14 = sbr.rel (0) target = $region5
    $region4: #{frame_encoder_forward.1} parent=1 // pred_region
      _
    $region5: #{frame_encoder_forward.1} parent=1 // pred_fallthru
      _
    // Predicated region
    $region6: #{frame_encoder_forward.1} parent=1 // pred_check
      _
    $region7: #{frame_encoder_forward.1} parent=1 // pred_check_branch
      %16 = sbr.rel (0) target = $region9
    $region8: #{frame_encoder_forward.1} parent=1 // pred_region
      _
    $region9: #{frame_encoder_forward.1} parent=1 // pred_fallthru
      _
    // Predicated region
    $region10: #{frame_encoder_forward.1} parent=1 // pred_check
      _
    $region11: #{frame_encoder_forward.1} parent=1 // pred_check_branch
      %18 = sbr.rel (0) target = $region13
    $region12: #{frame_encoder_forward.1} parent=1 // pred_region
      %s20 = ssub.s32 256, 256
      %21 = vsyncadd [#allocation3], %s20
      %s22 = sshll.u32 [#allocation2], 4
      %s23 = int_to_ptr.vmem [resolvable:$true] %s22
      %28 = dma.hbm_to_vmem [thread:$0]  %s2, 256, %s23, [#allocation3], 128, 128, 8
    $region13: #{frame_encoder_forward.1} parent=1 // pred_fallthru
      _
    // Predicated region
    $region14: #{frame_encoder_forward.1} parent=1 // pred_check
      _
    $region15: #{frame_encoder_forward.1} parent=1 // pred_check_branch
      %30 = sbr.rel (0) target = $region17
    $region16: #{frame_encoder_forward.1} parent=1 // pred_region
      _
    $region17: #{frame_encoder_forward.1} parent=1 // pred_fallthru
      _
    // Predicated region
    $region18: #{frame_encoder_forward.1} parent=1 // pred_check
      _
    $region19: #{frame_encoder_forward.1} parent=1 // pred_check_branch
      %32 = sbr.rel (0) target = $region21
    $region20: #{frame_encoder_forward.1} parent=1 // pred_region
      %s34 = ssub.s32 1600, 1600
      %35 = vsyncadd [#allocation5], %s34
      %s36 = sshll.u32 [#allocation4], 4
      %s37 = int_to_ptr.vmem [resolvable:$true] %s36
      %42 = dma.hbm_to_vmem [thread:$0]  %s4, 1600, %s37, [#allocation5], 64, 64, 4
    $region21: #{frame_encoder_forward.1} parent=1 // pred_fallthru
      _
    // Predicated region
    $region22: #{frame_encoder_forward.1} parent=1 // pred_check
      _
    $region23: #{frame_encoder_forward.1} parent=1 // pred_check_branch
      %44 = sbr.rel (0) target = $region25
    $region24: #{frame_encoder_forward.1} parent=1 // pred_region
      _
    $region25: #{frame_encoder_forward.1} parent=1 // pred_fallthru
      _
    // Predicated region
    $region26: #{frame_encoder_forward.1} parent=1 // pred_check
      _
    $region27: #{frame_encoder_forward.1} parent=1 // pred_check_branch
      %46 = sbr.rel (0) target = $region29
    $region28: #{frame_encoder_forward.1} parent=1 // pred_region
      %47 = dma.done [#allocation3], 256
    $region29: #{frame_encoder_forward.1} parent=1 // pred_fallthru
      _
    // Predicated region
    $region30: #{frame_encoder_forward.1} parent=1 // pred_check
      _
    $region31: #{frame_encoder_forward.1} parent=1 // pred_check_branch
      %49 = sbr.rel (0) target = $region33
    $region32: #{frame_encoder_forward.1} parent=1 // pred_region
      %50 = dma.done [#allocation5], 1600
    $region33: #{frame_encoder_forward.1} parent=1 // pred_fallthru
      _
    %v52 = vld [vmem:[%s0] sm:$0xff]
    %v53 = vld [vmem:[%s0 + $0x8] sm:$0xff]
    %vm54 = vcmask 523264
    %v55 = vsel %vm54, %v52, 0.0
    %v56 = vsel %vm54, %v53, 0.0
    %v57 = vadd.f32 %v55, %v56
    %v58 = vrot.slane %v57, 4
    %v59 = vadd.f32 %v57, %v58
    %v60 = vrot.slane %v59, 2
    %v61 = vadd.f32 %v59, %v60
    %v62 = vrot.slane %v61, 1
    %v63 = vadd.f32 %v61, %v62
    %v64 = vrcp.pop 16.0
    %v65 = vmul.f32 %v63, %v64
    %v66 = vsub.f32 %v52, %v65
    %v67 = vsub.f32 %v53, %v65
    %v68 = vmul.f32 %v66, %v66
    %v69 = vmul.f32 %v67, %v67
    %v70 = vsel %vm54, %v68, 0.0
    %v71 = vsel %vm54, %v69, 0.0
    %v72 = vadd.f32 %v70, %v71
    %v73 = vrot.slane %v72, 4
    %v74 = vadd.f32 %v72, %v73
    %v75 = vrot.slane %v74, 2
    %v76 = vadd.f32 %v74, %v75
    %v77 = vrot.slane %v76, 1
    %v78 = vadd.f32 %v76, %v77
    %v79 = vmul.f32 %v78, %v64
    %v80 = vadd.f32 %v79, 1e-08
    %v81 = vrsqrt.pop %v80
    %v82 = vmul.f32 %v66, %v81
    %v83 = vmul.f32 %v67, %v81
    %v84 = vld [vmem:[%s1] sm:$0xff]
    %v85 = vld [vmem:[%s1 + $0x8] sm:$0xff]
    %v86 = vmul.f32 %v82, %v84
    %v87 = vmul.f32 %v83, %v85
    %v88 = vld [vmem:[#allocation2] sm:$0xff]
    %v89 = vld [vmem:[#allocation2 + $0x8] sm:$0xff]
    %v90 = vadd.f32 %v86, %v88
    %v91 = vadd.f32 %v87, %v89
    %vm94 = vcmask 1040384
    %v95 = vrot.slane %v90, 7
    %v96 = vrot.slane %v91, 7
    %v97 = vsel %vm94, %v95, %v96
    %v100 = vsel %vm94, 0.0, %v95
    %vm101 = vcmask 1046528
    %v102 = vrot.slane %v90, 1
    %v103 = vrot.slane %v91, 1
    %v104 = vsel %vm101, %v102, %v103
    %v107 = vsel %vm101, %v103, 0.0
    %108 = vrot.lane.b32.xlu0 %v90, 64
    %v109 = vpop.permute.xlu0 %108
    %110 = vrot.lane.b32.xlu0 %v91, 64
    %v111 = vpop.permute.xlu0 %110
    %v114 = vsel %vm54, %v100, %v109
    %v115 = vsel %vm54, %v97, %v111
    %v116 = vsel %vm54, %v104, 1.0
    %v117 = vsel %vm54, %v107, 1.0
    %v118 = vpack.c.bf16 %v115, %v114
    %v119 = vpack.c.bf16 %v117, %v116
    %v120 = vld [vmem:[#allocation4] sm:$0xf]
    %v121 = vld [vmem:[#allocation4 + $0x4] sm:$0xf]
    %v122 = vld [vmem:[#allocation4 + $0x8] sm:$0xf]
    %v123 = vld [vmem:[#allocation4 + $0xc] sm:$0xf]
    %v124 = vld [vmem:[#allocation4 + $0x10] sm:$0xf]
    %v125 = vld [vmem:[#allocation4 + $0x14] sm:$0xf]
    %v126 = vld [vmem:[#allocation4 + $0x18] sm:$0xf]
    %v127 = vld [vmem:[#allocation4 + $0x1c] sm:$0xf]
    %v128 = vld [vmem:[#allocation4 + $0x20] sm:$0xf]
    %v129 = vld [vmem:[#allocation4 + $0x24] sm:$0xf]
    %v130 = vld [vmem:[#allocation4 + $0x28] sm:$0xf]
    %v131 = vld [vmem:[#allocation4 + $0x2c] sm:$0xf]
    %v132 = vld [vmem:[#allocation4 + $0x30] sm:$0xf]
    %v133 = vld [vmem:[#allocation4 + $0x34] sm:$0xf]
    %v134 = vld [vmem:[#allocation4 + $0x38] sm:$0xf]
    %v135 = vld [vmem:[#allocation4 + $0x3c] sm:$0xf]
    %v136 = vld [vmem:[#allocation4 + $0x40] sm:$0xf]
    %v137 = vld [vmem:[#allocation4 + $0x44] sm:$0xf]
    %v138 = vld [vmem:[#allocation4 + $0x48] sm:$0xf]
    %v139 = vld [vmem:[#allocation4 + $0x4c] sm:$0xf]
    %v140 = vld [vmem:[#allocation4 + $0x50] sm:$0xf]
    %v141 = vld [vmem:[#allocation4 + $0x54] sm:$0xf]
    %v142 = vld [vmem:[#allocation4 + $0x58] sm:$0xf]
    %v143 = vld [vmem:[#allocation4 + $0x5c] sm:$0xf]
    %v144 = vld [vmem:[#allocation4 + $0x60] sm:$0x1]
    %v170 = vunpack.c.l.b16 %v120
    %v171 = vunpack.c.l.b16 %v121
    %v172 = vunpack.c.l.b16 %v122
    %v173 = vunpack.c.l.b16 %v123
    %v174 = vunpack.c.l.b16 %v124
    %v175 = vunpack.c.l.b16 %v125
    %v176 = vunpack.c.l.b16 %v126
    %v177 = vunpack.c.l.b16 %v127
    %v178 = vunpack.c.l.b16 %v128
    %v179 = vunpack.c.l.b16 %v129
    %v180 = vunpack.c.l.b16 %v130
    %v181 = vunpack.c.l.b16 %v131
    %v182 = vunpack.c.l.b16 %v132
    %v183 = vunpack.c.l.b16 %v133
    %v184 = vunpack.c.l.b16 %v134
    %v185 = vunpack.c.l.b16 %v135
    %v186 = vunpack.c.l.b16 %v136
    %v187 = vunpack.c.l.b16 %v137
    %v188 = vunpack.c.l.b16 %v138
    %v189 = vunpack.c.l.b16 %v139
    %v190 = vunpack.c.l.b16 %v140
    %v191 = vunpack.c.l.b16 %v141
    %v192 = vunpack.c.l.b16 %v142
    %v193 = vunpack.c.l.b16 %v143
    %v194 = vunpack.c.l.b16 %v144
    %v195 = vpack.c.b16 %v171, %v170
    %v196 = vpack.c.b16 %v173, %v172
    %v197 = vpack.c.b16 %v175, %v174
    %v198 = vpack.c.b16 %v177, %v176
    %v199 = vpack.c.b16 %v179, %v178
    %v200 = vpack.c.b16 %v181, %v180
    %v201 = vpack.c.b16 %v183, %v182
    %v202 = vpack.c.b16 %v185, %v184
    %v203 = vpack.c.b16 %v187, %v186
    %v204 = vpack.c.b16 %v189, %v188
    %v205 = vpack.c.b16 %v191, %v190
    %v206 = vpack.c.b16 %v193, %v192
    %v207 = vpack.c.b16 %v194, %v194
    %vm220 = vcmask 531456
    %v222 = vsel %vm220, %v119, 0
    %v224 = vsel 0, 4294967295, 65535
    %v225 = vsel %vm94, %v224, 0
    %v227 = vand.u32 %v207, %v225
    %229 = vmatprep.subr.bf16.mxu0 0
    %230 = vmatpush1.bf16.msra.mxu0 %v195
    %231 = vmatprep.subr.bf16.mxu0 0
    %232 = vmatpush1.bf16.msra.mxu0 %v196
    %233 = vmatprep.subr.bf16.mxu0 0
    %234 = vmatpush1.bf16.msra.mxu0 %v197
    %235 = vmatprep.subr.bf16.mxu0 0
    %236 = vmatpush1.bf16.msra.mxu0 %v198
    %237 = vmatprep.subr.bf16.mxu0 0
    %238 = vmatpush1.bf16.msra.mxu0 %v199
    %239 = vmatprep.subr.bf16.mxu0 0
    %240 = vmatpush1.bf16.msra.mxu0 %v200
    %241 = vmatprep.subr.bf16.mxu0 0
    %242 = vmatpush1.bf16.msra.mxu0 %v201
    %243 = vmatprep.subr.bf16.mxu0 0
    %244 = vmatpush1.bf16.msra.mxu0 %v202
    %245 = vmatprep.subr.bf16.mxu0 0
    %246 = vmatpush1.bf16.msra.mxu0 %v203
    %247 = vmatprep.subr.bf16.mxu0 0
    %248 = vmatpush1.bf16.msra.mxu0 %v204
    %249 = vmatprep.subr.bf16.mxu0 0
    %250 = vmatpush1.bf16.msra.mxu0 %v205
    %251 = vmatprep.subr.bf16.mxu0 0
    %252 = vmatpush1.bf16.msra.mxu0 %v206
    %253 = vmatprep.subr.bf16.mxu0 0
    %254 = vmatpush1.bf16.msra.mxu0 %v227
    %255 = vmatprep.subr.bf16.mxu0 0
    %256 = vmatpush1.bf16.msra.mxu0 0
    %257 = vmatprep.subr.bf16.mxu0 0
    %258 = vmatpush1.bf16.msra.mxu0 0
    %259 = vmatprep.subr.bf16.mxu0 0
    %260 = vmatpush1.bf16.msra.mxu0 0
    %261 = vmatprep.mubr.bf16.mxu0 %v222
    %262 = vmatmul.mubr.bf16.gmra.mrb[0].mxu0 %v118
    %v263 = vpop.f32.mrb[0].mxu0
    %v264 = vadd.f32 0.0, %v263
    %v265 = vpop.f32.mrb[0].mxu0
    %v266 = vpop.f32.mrb[0].mxu0
    %v267 = vadd.f32 0.0, %v266
    %v268 = vpop.f32.mrb[0].mxu0
    %269 = vdwg.mxu0
    %v270 = vmax.f32 %v264, 0.0
    %v271 = vmax.f32 %v267, 0.0
    %v272 = vpack.c.bf16 %v271, %v270
    %v273 = vpack.c.bf16 %v53, %v52
    %v274 = vld [vmem:[%s3] sm:$0xf]
    %v275 = vld [vmem:[%s3 + $0x4] sm:$0xf]
    %v276 = vld [vmem:[%s3 + $0x8] sm:$0xf]
    %v280 = vunpack.c.l.b16 %v274
    %v281 = vunpack.c.l.b16 %v275
    %v282 = vunpack.c.l.b16 %v276
    %v283 = vpack.c.b16 %v281, %v280
    %v284 = vpack.c.b16 %v282, %v282
    %vm285 = vcmask 130048
    %v287 = vsel %vm285, %v283, 0
    %v290 = vsel %vm285, %v284, 0
    %292 = vmatprep.subr.bf16.mxu0 %v273
    %293 = vmatpush1.bf16.msra.mxu0 %v272
    %294 = vmatprep.subr.bf16.mxu0 0
    %295 = vmatpush1.bf16.msra.mxu0 0
    %296 = vmatprep.subr.bf16.mxu0 0
    %297 = vmatpush1.bf16.msra.mxu0 0
    %298 = vmatprep.subr.bf16.mxu0 0
    %299 = vmatpush1.bf16.msra.mxu0 0
    %300 = vmatprep.subr.bf16.mxu0 0
    %301 = vmatpush1.bf16.msra.mxu0 0
    %302 = vmatprep.subr.bf16.mxu0 0
    %303 = vmatpush1.bf16.msra.mxu0 0
    %304 = vmatprep.subr.bf16.mxu0 0
    %305 = vmatpush1.bf16.msra.mxu0 0
    %306 = vmatprep.subr.bf16.mxu0 0
    %307 = vmatpush1.bf16.msra.mxu0 0
    %308 = vmatprep.subr.bf16.mxu0 0
    %309 = vmatpush1.bf16.msra.mxu0 0
    %310 = vmatprep.subr.bf16.mxu0 0
    %311 = vmatpush1.bf16.msra.mxu0 0
    %312 = vmatprep.subr.bf16.mxu0 0
    %313 = vmatpush1.bf16.msra.mxu0 0
    %314 = vmatprep.subr.bf16.mxu0 0
    %315 = vmatpush1.bf16.msra.mxu0 0
    %316 = vmatprep.subr.bf16.mxu0 0
    %317 = vmatpush1.bf16.msra.mxu0 0
    %318 = vmatprep.subr.bf16.mxu0 0
    %319 = vmatpush1.bf16.msra.mxu0 0
    %320 = vmatprep.subr.bf16.mxu0 0
    %321 = vmatpush1.bf16.msra.mxu0 0
    %322 = vmatprep.subr.bf16.mxu0 0
    %323 = vmatpush1.bf16.msra.mxu0 0
    %324 = vmatprep.mubr.bf16.mxu0 0
    %325 = vmatmul.mubr.bf16.gmra.mrb[0].mxu0 %v287
    %v326 = vpop.f32.mrb[0].mxu0
    %v327 = vadd.f32 0.0, %v326
    %v328 = vpop.f32.mrb[0].mxu0
    %v329 = vpop.f32.mrb[0].mxu0
    %v330 = vadd.f32 0.0, %v329
    %v331 = vpop.f32.mrb[0].mxu0
    %v332 = vadd.f32 0.0, %v331
    %333 = vmatprep.mubr.bf16.mxu0 0
    %334 = vmatmul.mubr.bf16.gmra.mrb[0].mxu0 %v290
    %v335 = vpop.f32.mrb[0].mxu0
    %v336 = vadd.f32 0.0, %v335
    %v337 = vpop.f32.mrb[0].mxu0
    %v338 = vpop.f32.mrb[0].mxu0
    %v339 = vpop.f32.mrb[0].mxu0
    %340 = vdwg.mxu0
    %v341 = vsel %vm54, %v332, 1.0
    %v342 = vpack.c.bf16 %v327, %v327
    %v343 = vpack.c.bf16 %v330, %v330
    %v344 = vpack.c.bf16 %v336, %v336
    %v345 = vpack.c.bf16 %v341, %v341
    %v346 = vld [vmem:[%s5] sm:$0xf]
    %v347 = vld [vmem:[%s5 + $0x4] sm:$0xf]
    %v348 = vld [vmem:[%s5 + $0x8] sm:$0xf]
    %v349 = vld [vmem:[%s5 + $0xc] sm:$0xf]
    %v350 = vld [vmem:[%s5 + $0x10] sm:$0xf]
    %v351 = vld [vmem:[%s5 + $0x14] sm:$0xf]
    %v352 = vld [vmem:[%s5 + $0x18] sm:$0xf]
    %v353 = vld [vmem:[%s5 + $0x1c] sm:$0xf]
    %v354 = vld [vmem:[%s5 + $0x20] sm:$0xf]
    %v355 = vld [vmem:[%s5 + $0x24] sm:$0xf]
    %v356 = vld [vmem:[%s5 + $0x28] sm:$0xf]
    %v357 = vld [vmem:[%s5 + $0x2c] sm:$0xf]
    %v358 = vld [vmem:[%s5 + $0x30] sm:$0xf]
    %v359 = vld [vmem:[%s5 + $0x34] sm:$0xf]
    %v360 = vld [vmem:[%s5 + $0x38] sm:$0xf]
    %v361 = vld [vmem:[%s5 + $0x3c] sm:$0xf]
    %v362 = vld [vmem:[%s5 + $0x40] sm:$0xf]
    %v363 = vld [vmem:[%s5 + $0x44] sm:$0xf]
    %v364 = vld [vmem:[%s5 + $0x48] sm:$0xf]
    %v365 = vld [vmem:[%s5 + $0x4c] sm:$0xf]
    %v366 = vld [vmem:[%s5 + $0x50] sm:$0xf]
    %v367 = vld [vmem:[%s5 + $0x54] sm:$0xf]
    %v368 = vld [vmem:[%s5 + $0x58] sm:$0xf]
    %v369 = vld [vmem:[%s5 + $0x5c] sm:$0xf]
    %v370 = vld [vmem:[%s5 + $0x60] sm:$0xf]
    %v371 = vld [vmem:[%s5 + $0x64] sm:$0xf]
    %v372 = vld [vmem:[%s5 + $0x68] sm:$0xf]
    %v373 = vld [vmem:[%s5 + $0x6c] sm:$0xf]
    %v374 = vld [vmem:[%s5 + $0x70] sm:$0xf]
    %v375 = vld [vmem:[%s5 + $0x74] sm:$0xf]
    %v376 = vld [vmem:[%s5 + $0x78] sm:$0xf]
    %v377 = vld [vmem:[%s5 + $0x7c] sm:$0xf]
    %v378 = vld [vmem:[%s5 + $0x80] sm:$0xf]
    %v379 = vld [vmem:[%s5 + $0x84] sm:$0xf]
    %v380 = vld [vmem:[%s5 + $0x88] sm:$0xf]
    %v381 = vld [vmem:[%s5 + $0x8c] sm:$0xf]
    %v382 = vld [vmem:[%s5 + $0x90] sm:$0xf]
    %v383 = vld [vmem:[%s5 + $0x94] sm:$0xf]
    %v384 = vld [vmem:[%s5 + $0x98] sm:$0xf]
    %v385 = vld [vmem:[%s5 + $0x9c] sm:$0xf]
    %v386 = vld [vmem:[%s5 + $0xa0] sm:$0xf]
    %v387 = vld [vmem:[%s5 + $0xa4] sm:$0xf]
    %v388 = vld [vmem:[%s5 + $0xa8] sm:$0xf]
    %v389 = vld [vmem:[%s5 + $0xac] sm:$0xf]
    %v390 = vld [vmem:[%s5 + $0xb0] sm:$0xf]
    %v391 = vld [vmem:[%s5 + $0xb4] sm:$0xf]
    %v392 = vld [vmem:[%s5 + $0xb8] sm:$0xf]
    %v393 = vld [vmem:[%s5 + $0xbc] sm:$0xf]
    %v394 = vld [vmem:[%s5 + $0xc0] sm:$0xf]
    %v395 = vld [vmem:[%s5 + $0xc4] sm:$0xf]
    %v396 = vld [vmem:[%s5 + $0xc8] sm:$0xf]
    %v397 = vld [vmem:[%s5 + $0xcc] sm:$0xf]
    %v398 = vld [vmem:[%s5 + $0xd0] sm:$0xf]
    %v399 = vld [vmem:[%s5 + $0xd4] sm:$0xf]
    %v400 = vld [vmem:[%s5 + $0xd8] sm:$0xf]
    %v401 = vld [vmem:[%s5 + $0xdc] sm:$0xf]
    %v402 = vld [vmem:[%s5 + $0xe0] sm:$0x1]
    %v460 = vunpack.c.l.b16 %v346
    %v461 = vunpack.c.l.b16 %v347
    %v462 = vunpack.c.l.b16 %v348
    %v463 = vunpack.c.l.b16 %v349
    %v464 = vunpack.c.l.b16 %v350
    %v465 = vunpack.c.l.b16 %v351
    %v466 = vunpack.c.l.b16 %v352
    %v467 = vunpack.c.l.b16 %v353
    %v468 = vunpack.c.l.b16 %v354
    %v469 = vunpack.c.l.b16 %v355
    %v470 = vunpack.c.l.b16 %v356
    %v471 = vunpack.c.l.b16 %v357
    %v472 = vunpack.c.l.b16 %v358
    %v473 = vunpack.c.l.b16 %v359
    %v474 = vunpack.c.l.b16 %v360
    %v475 = vunpack.c.l.b16 %v361
    %v476 = vunpack.c.l.b16 %v362
    %v477 = vunpack.c.l.b16 %v363
    %v478 = vunpack.c.l.b16 %v364
    %v479 = vunpack.c.l.b16 %v365
    %v480 = vunpack.c.l.b16 %v366
    %v481 = vunpack.c.l.b16 %v367
    %v482 = vunpack.c.l.b16 %v368
    %v483 = vunpack.c.l.b16 %v369
    %v484 = vunpack.c.l.b16 %v370
    %v485 = vunpack.c.l.b16 %v371
    %v486 = vunpack.c.l.b16 %v372
    %v487 = vunpack.c.l.b16 %v373
    %v488 = vunpack.c.l.b16 %v374
    %v489 = vunpack.c.l.b16 %v375
    %v490 = vunpack.c.l.b16 %v376
    %v491 = vunpack.c.l.b16 %v377
    %v492 = vunpack.c.l.b16 %v378
    %v493 = vunpack.c.l.b16 %v379
    %v494 = vunpack.c.l.b16 %v380
    %v495 = vunpack.c.l.b16 %v381
    %v496 = vunpack.c.l.b16 %v382
    %v497 = vunpack.c.l.b16 %v383
    %v498 = vunpack.c.l.b16 %v384
    %v499 = vunpack.c.l.b16 %v385
    %v500 = vunpack.c.l.b16 %v386
    %v501 = vunpack.c.l.b16 %v387
    %v502 = vunpack.c.l.b16 %v388
    %v503 = vunpack.c.l.b16 %v389
    %v504 = vunpack.c.l.b16 %v390
    %v505 = vunpack.c.l.b16 %v391
    %v506 = vunpack.c.l.b16 %v392
    %v507 = vunpack.c.l.b16 %v393
    %v508 = vunpack.c.l.b16 %v394
    %v509 = vunpack.c.l.b16 %v395
    %v510 = vunpack.c.l.b16 %v396
    %v511 = vunpack.c.l.b16 %v397
    %v512 = vunpack.c.l.b16 %v398
    %v513 = vunpack.c.l.b16 %v399
    %v514 = vunpack.c.l.b16 %v400
    %v515 = vunpack.c.l.b16 %v401
    %v516 = vunpack.c.l.b16 %v402
    %v517 = vpack.c.b16 %v461, %v460
    %v518 = vpack.c.b16 %v463, %v462
    %v519 = vpack.c.b16 %v465, %v464
    %v520 = vpack.c.b16 %v467, %v466
    %v521 = vpack.c.b16 %v469, %v468
    %v522 = vpack.c.b16 %v471, %v470
    %v523 = vpack.c.b16 %v473, %v472
    %v524 = vpack.c.b16 %v475, %v474
    %v525 = vpack.c.b16 %v477, %v476
    %v526 = vpack.c.b16 %v479, %v478
    %v527 = vpack.c.b16 %v481, %v480
    %v528 = vpack.c.b16 %v483, %v482
    %v529 = vpack.c.b16 %v485, %v484
    %v530 = vpack.c.b16 %v487, %v486
    %v531 = vpack.c.b16 %v489, %v488
    %v532 = vpack.c.b16 %v491, %v490
    %v533 = vpack.c.b16 %v493, %v492
    %v534 = vpack.c.b16 %v495, %v494
    %v535 = vpack.c.b16 %v497, %v496
    %v536 = vpack.c.b16 %v499, %v498
    %v537 = vpack.c.b16 %v501, %v500
    %v538 = vpack.c.b16 %v503, %v502
    %v539 = vpack.c.b16 %v505, %v504
    %v540 = vpack.c.b16 %v507, %v506
    %v541 = vpack.c.b16 %v509, %v508
    %v542 = vpack.c.b16 %v511, %v510
    %v543 = vpack.c.b16 %v513, %v512
    %v544 = vpack.c.b16 %v515, %v514
    %v545 = vpack.c.b16 %v516, %v516
    %v575 = vsel %vm220, %v345, 0
    %v578 = vand.u32 %v545, %v225
    %580 = vmatprep.subr.bf16.mxu0 0
    %581 = vmatpush1.bf16.msra.mxu0 %v517
    %582 = vmatprep.subr.bf16.mxu0 0
    %583 = vmatpush1.bf16.msra.mxu0 %v518
    %584 = vmatprep.subr.bf16.mxu0 0
    %585 = vmatpush1.bf16.msra.mxu0 %v519
    %586 = vmatprep.subr.bf16.mxu0 0
    %587 = vmatpush1.bf16.msra.mxu0 %v520
    %588 = vmatprep.subr.bf16.mxu0 0
    %589 = vmatpush1.bf16.msra.mxu0 %v521
    %590 = vmatprep.subr.bf16.mxu0 0
    %591 = vmatpush1.bf16.msra.mxu0 %v522
    %592 = vmatprep.subr.bf16.mxu0 0
    %593 = vmatpush1.bf16.msra.mxu0 %v523
    %594 = vmatprep.subr.bf16.mxu0 0
    %595 = vmatpush1.bf16.msra.mxu0 %v524
    %596 = vmatprep.subr.bf16.mxu0 0
    %597 = vmatpush1.bf16.msra.mxu0 %v525
    %598 = vmatprep.subr.bf16.mxu0 0
    %599 = vmatpush1.bf16.msra.mxu0 %v526
    %600 = vmatprep.subr.bf16.mxu0 0
    %601 = vmatpush1.bf16.msra.mxu0 %v527
    %602 = vmatprep.subr.bf16.mxu0 0
    %603 = vmatpush1.bf16.msra.mxu0 %v528
    %604 = vmatprep.subr.bf16.mxu0 0
    %605 = vmatpush1.bf16.msra.mxu0 %v529
    %606 = vmatprep.subr.bf16.mxu0 0
    %607 = vmatpush1.bf16.msra.mxu0 %v530
    %608 = vmatprep.subr.bf16.mxu0 0
    %609 = vmatpush1.bf16.msra.mxu0 %v531
    %610 = vmatprep.subr.bf16.mxu0 0
    %611 = vmatpush1.bf16.msra.mxu0 %v532
    %612 = vmatprep.mubr.bf16.mxu0 %v343
    %613 = vmatmul.mubr.bf16.gmra.mrb[0].mxu0 %v342
    %v614 = vpop.f32.mrb[0].mxu0
    %v615 = vadd.f32 0.0, %v614
    %v616 = vpop.f32.mrb[0].mxu0
    %v617 = vpop.f32.mrb[0].mxu0
    %v618 = vpop.f32.mrb[0].mxu0
    %619 = vdwg.mxu0
    %620 = vmatprep.subr.bf16.mxu0 0
    %621 = vmatpush1.bf16.msra.mxu0 %v533
    %622 = vmatprep.subr.bf16.mxu0 0
    %623 = vmatpush1.bf16.msra.mxu0 %v534
    %624 = vmatprep.subr.bf16.mxu0 0
    %625 = vmatpush1.bf16.msra.mxu0 %v535
    %626 = vmatprep.subr.bf16.mxu0 0
    %627 = vmatpush1.bf16.msra.mxu0 %v536
    %628 = vmatprep.subr.bf16.mxu0 0
    %629 = vmatpush1.bf16.msra.mxu0 %v537
    %630 = vmatprep.subr.bf16.mxu0 0
    %631 = vmatpush1.bf16.msra.mxu0 %v538
    %632 = vmatprep.subr.bf16.mxu0 0
    %633 = vmatpush1.bf16.msra.mxu0 %v539
    %634 = vmatprep.subr.bf16.mxu0 0
    %635 = vmatpush1.bf16.msra.mxu0 %v540
    %636 = vmatprep.subr.bf16.mxu0 0
    %637 = vmatpush1.bf16.msra.mxu0 %v541
    %638 = vmatprep.subr.bf16.mxu0 0
    %639 = vmatpush1.bf16.msra.mxu0 %v542
    %640 = vmatprep.subr.bf16.mxu0 0
    %641 = vmatpush1.bf16.msra.mxu0 %v543
    %642 = vmatprep.subr.bf16.mxu0 0
    %643 = vmatpush1.bf16.msra.mxu0 %v544
    %644 = vmatprep.subr.bf16.mxu0 0
    %645 = vmatpush1.bf16.msra.mxu0 %v578
    %646 = vmatprep.subr.bf16.mxu0 0
    %647 = vmatpush1.bf16.msra.mxu0 0
    %648 = vmatprep.subr.bf16.mxu0 0
    %649 = vmatpush1.bf16.msra.mxu0 0
    %650 = vmatprep.subr.bf16.mxu0 0
    %651 = vmatpush1.bf16.msra.mxu0 0
    %652 = vmatprep.mubr.bf16.mxu0 %v575
    %653 = vmatmul.mubr.bf16.gmra.mrb[0].mxu0 %v344
    %v654 = vpop.f32.mrb[0].mxu0
    %v655 = vadd.f32 %v615, %v654
    %v656 = vpop.f32.mrb[0].mxu0
    %v657 = vpop.f32.mrb[0].mxu0
    %v658 = vpop.f32.mrb[0].mxu0
    %659 = vdwg.mxu0
    %660 = vst [vmem:[%s6] sm:$0xff] %v655
    // Predicated region
    $region34: #{frame_encoder_forward.1} parent=1 // pred_check
      _
    $region35: #{frame_encoder_forward.1} parent=1 // pred_check_branch
      %662 = sbr.rel (0) target = $region37
    $region36: #{frame_encoder_forward.1} parent=1 // pred_region
      _
    $region37: #{frame_encoder_forward.1} parent=1 // pred_fallthru
      _
    // Predicated region
    $region38: #{frame_encoder_forward.1} parent=1 // pred_check
      _
    $region39: #{frame_encoder_forward.1} parent=1 // pred_check_branch
      %664 = sbr.rel (0) target = $region41
    $region40: #{frame_encoder_forward.1} parent=1 // pred_region
      _
    $region41: #{frame_encoder_forward.1} parent=1 // pred_fallthru
      _
    %665 = vsyncpa [#allocation3], 1
    %666 = vsyncpa [#allocation5], 1

</llo_original>
